<compile_context>
chip_gen: v5e
topology: v5e:2x2
jax: 0.10.0
libtpu: 0.0.40
codegen_flags: <defaults>
</compile_context>

<pallas_src>
from functools import partial

import jax
import jax.numpy as jnp
from jax.experimental import pallas as pl
from jax.experimental.pallas import tpu as pltpu

_OUT_LANES = 128  # lane-aligned accumulator; first len(topk) lanes are used


def _topk_accuracy_kernel(logits_ref, target_ref, out_ref, *,
                          topk, batch_size, block_rows, compute_dtype):
    i = pl.program_id(0)

    @pl.when(i == 0)
    def _():
        out_ref[...] = jnp.zeros_like(out_ref)

    logits = logits_ref[...].astype(compute_dtype)      # (TB, C)
    tgt = target_ref[...]                               # (TB, 1) int32
    tb, c = logits.shape

    col = jax.lax.broadcasted_iota(jnp.int32, (tb, c), 1)
    is_tgt = col == tgt                                 # one-hot of target class
    tgt_logit = jnp.max(jnp.where(is_tgt, logits, -jnp.inf),
                        axis=1, keepdims=True)          # (TB, 1)

    # Number of classes ranked ahead of the target (strictly greater, or equal
    # with a lower class index -> matches lax.top_k tie order).
    beats = (logits > tgt_logit) | ((logits == tgt_logit) & (col < tgt))
    rank = jnp.sum(beats.astype(jnp.int32), axis=1, keepdims=True)   # (TB, 1)

    # Padded rows of a ragged last tile must never register as hits.  Only pay
    # for the mask when the batch is not a multiple of the block size.
    if batch_size % block_rows != 0:
        row = jax.lax.broadcasted_iota(jnp.int32, (tb, 1), 0)
        valid = (i * block_rows + row) < batch_size
        rank = jnp.where(valid, rank, 2 ** 30)

    # Lane idx holds k = topk[idx]; lanes >= len(topk) get k = 0 (never a hit,
    # rank >= 0).  One broadcast compare + one sublane reduction covers all ks.
    lane = jax.lax.broadcasted_iota(jnp.int32, (1, out_ref.shape[-1]), 1)
    k_vec = jnp.zeros((1, out_ref.shape[-1]), jnp.int32)
    for idx, k in enumerate(topk):
        k_vec = jnp.where(lane == idx, k, k_vec)
    hits = (rank < k_vec).astype(jnp.float32)            # (TB, 128)
    out_ref[...] += jnp.sum(hits, axis=0, keepdims=True)


def _choose_block_rows(batch, classes, dtype_bytes):
    # ~2 MiB for one logits tile: the BlockSpec pipeline double-buffers it and
    # the (rows, classes) int32/mask temporaries scale with it, so this stays
    # comfortably inside the 32 MiB scoped VMEM limit on every gen while still
    # being far above the per-step-overhead regime (>512 KiB per DMA).
    # TODO(synk): for vocab-scale class counts, also tile the class axis.
    budget_bytes = 2 * 1024 * 1024
    tb = budget_bytes // max(1, classes * dtype_bytes)
    tb = min(1024, tb)
    tb = max(8, (tb // 8) * 8)
    if batch <= tb:
        return batch          # single tile; block dim == full array dim is allowed
    return tb


def _compute_dtype(in_dtype):
    if in_dtype == jnp.dtype(jnp.float32):
        return jnp.float32
    try:
        kind = jax.devices()[0].device_kind.lower()
    except Exception:
        kind = ""
    # v6e / v7x have a bf16 VPU: compare natively.  Older gens cast in-kernel
    # (HBM still only moves the narrow dtype; the cast hides under the DMA).
    if ("v6" in kind) or ("v7" in kind):
        return in_dtype
    return jnp.float32


def topk_accuracy(output, target, topk=(1,), block_rows=None):
    """output: (B, C) float logits (any float dtype); target: (B,) int class ids.
    Returns a list of shape-(1,) float32 arrays, one per k (like the module)."""
    B, C = output.shape
    num_k = len(topk)
    assert num_k <= _OUT_LANES
    target2d = target.astype(jnp.int32).reshape(B, 1)

    if block_rows is None:
        block_rows = _choose_block_rows(B, C, jnp.dtype(output.dtype).itemsize)
    tb = block_rows
    num_tiles = (B + tb - 1) // tb
    compute_dtype = _compute_dtype(jnp.dtype(output.dtype))

    kernel = partial(_topk_accuracy_kernel,
                     topk=tuple(int(k) for k in topk),
                     batch_size=B,
                     block_rows=tb,
                     compute_dtype=compute_dtype)

    counts = pl.pallas_call(
        kernel,
        out_shape=jax.ShapeDtypeStruct((1, _OUT_LANES), jnp.float32),
        grid=(num_tiles,),
        in_specs=[pl.BlockSpec((tb, C), lambda i: (i, 0)),
                  pl.BlockSpec((tb, 1), lambda i: (i, 0))],
        out_specs=pl.BlockSpec((1, _OUT_LANES), lambda i: (0, 0)),
        compiler_params=pltpu.CompilerParams(
            dimension_semantics=("arbitrary",),
            vmem_limit_bytes=32 * 1024 * 1024),
    )(output, target2d)   # native dtype fed straight from HBM (no wrapper cast)

    scale = 100.0 / B     # GLOBAL batch size
    return [counts[0, i:i + 1] * scale for i in range(num_k)]


def _reference(output, target, topk=(1,)):
    """Pure-JAX reference mirroring the PyTorch module."""
    maxk = max(topk)
    B = target.shape[0]
    _, pred = jax.lax.top_k(output, maxk)             # (B, maxk)
    pred = pred.T                                      # (maxk, B)
    correct = pred == target.reshape(1, -1)
    return [jnp.sum(correct[:k].astype(jnp.float32)).reshape(1) * (100.0 / B)
            for k in topk]


if __name__ == "__main__":
    key = jax.random.PRNGKey(0)
    k1, k2, k3, k4 = jax.random.split(key, 4)

    # --- small single-tile test (f32 and bf16 paths) ---
    batch, num_classes = 8, 32
    topk = (1, 5)

    logits = jax.random.normal(k1, (batch, num_classes), dtype=jnp.float32)
    target = jax.random.randint(k2, (batch,), 0, num_classes, dtype=jnp.int32)

    res = topk_accuracy(logits, target, topk=topk)
    res = [jax.block_until_ready(r) for r in res]
    ref = _reference(logits, target, topk=topk)
    for r, rr in zip(res, ref):
        assert r.shape == (1,), r.shape
        assert jnp.allclose(r, rr, atol=1e-5), (r, rr)

    logits_bf16 = logits.astype(jnp.bfloat16)
    res_bf = topk_accuracy(logits_bf16, target, topk=topk)
    res_bf = [jax.block_until_ready(r) for r in res_bf]
    ref_bf = _reference(logits_bf16.astype(jnp.float32), target, topk=topk)
    for r, rr in zip(res_bf, ref_bf):
        assert r.shape == (1,), r.shape
        assert jnp.allclose(r, rr, atol=1e-5), (r, rr)

    # --- multi-tile + ragged-last-tile test (forced small block) ---
    batch2, classes2 = 20, 64
    logits2 = jax.random.normal(k3, (batch2, classes2), dtype=jnp.float32)
    target2 = jax.random.randint(k4, (batch2,), 0, classes2, dtype=jnp.int32)
    res2 = topk_accuracy(logits2, target2, topk=topk, block_rows=8)
    res2 = [jax.block_until_ready(r) for r in res2]
    ref2 = _reference(logits2, target2, topk=topk)
    for r, rr in zip(res2, ref2):
        assert r.shape == (1,), r.shape
        assert jnp.allclose(r, rr, atol=1e-5), (r, rr)

    print("KERNEL_OK")
</pallas_src>

<mosaic_0001>
module attributes {stable_mosaic.version = 11 : i64} {
  func.func @_topk_accuracy_kernel(%arg0: i32, %arg1: memref<8x32xf32, #tpu.memory_space<vmem>>, %arg2: memref<8x1xi32, #tpu.memory_space<vmem>>, %arg3: memref<1x128xf32, #tpu.memory_space<vmem>>) attributes {dimension_semantics = [#tpu.dimension_semantics<arbitrary>], iteration_bounds = array<i64: 1>, scalar_prefetch = 0 : i64, scratch_operands = 0 : i64, tpu.core_type = #tpu.core_type<tc>, window_params = [{transform_indices = @transform_0, window_bounds = array<i64: 8, 32>}, {transform_indices = @transform_1, window_bounds = array<i64: 8, 1>}, {pipeline_mode = #tpu.pipeline_mode<synchronous>, transform_indices = @transform_2, window_bounds = array<i64: 1, 128>}]} {
    %c0_i32 = arith.constant 0 : i32
    %0 = arith.cmpi eq, %arg0, %c0_i32 : i32
    %1 = arith.extui %0 : i1 to i32
    %c0_i32_0 = arith.constant 0 : i32
    %2 = arith.cmpi ne, %1, %c0_i32_0 : i32
    scf.if %2 {
      %cst_14 = arith.constant 0.000000e+00 : f32
      %43 = vector.broadcast %cst_14 : f32 to vector<1x128xf32>
      %c0_15 = arith.constant 0 : index
      %c0_16 = arith.constant 0 : index
      %44 = vector.load %arg3[%c0_15, %c0_16] : memref<1x128xf32, #tpu.memory_space<vmem>>, vector<1x128xf32>
      tpu.vector_store %arg3[%c0_15, %c0_16], %43 {strides = array<i32>} : memref<1x128xf32, #tpu.memory_space<vmem>>, vector<1x128xf32>,
    } else {
    }
    %c0 = arith.constant 0 : index
    %c0_1 = arith.constant 0 : index
    %3 = vector.load %arg1[%c0, %c0_1] : memref<8x32xf32, #tpu.memory_space<vmem>>, vector<8x32xf32>
    %c0_2 = arith.constant 0 : index
    %c0_3 = arith.constant 0 : index
    %4 = vector.load %arg2[%c0_2, %c0_3] : memref<8x1xi32, #tpu.memory_space<vmem>>, vector<8x1xi32>
    %5 = tpu.iota {dimensions = array<i32: 1>} : vector<8x32xi32>
    %6 = vector.broadcast %4 : vector<8x1xi32> to vector<8x32xi32>
    %7 = arith.cmpi eq, %5, %6 : vector<8x32xi32>
    %cst = arith.constant 0xFF800000 : f32
    %8 = vector.broadcast %cst : f32 to vector<8x32xf32>
    %9 = arith.select %7, %3, %8 : vector<8x32xi1>, vector<8x32xf32>
    %cst_4 = arith.constant dense<0xFF800000> : vector<8xf32>
    %10 = vector.multi_reduction <maximumf>, %9, %cst_4 [1] : vector<8x32xf32> to vector<8xf32>
    %11 = vector.shape_cast %10 : vector<8xf32> to vector<8x1xf32>
    %12 = vector.broadcast %11 : vector<8x1xf32> to vector<8x32xf32>
    %13 = arith.cmpf ogt, %3, %12 : vector<8x32xf32>
    %14 = vector.broadcast %11 : vector<8x1xf32> to vector<8x32xf32>
    %15 = arith.cmpf oeq, %3, %14 : vector<8x32xf32>
    %16 = vector.broadcast %4 : vector<8x1xi32> to vector<8x32xi32>
    %17 = arith.cmpi slt, %5, %16 : vector<8x32xi32>
    %18 = arith.andi %15, %17 : vector<8x32xi1>
    %19 = arith.ori %13, %18 : vector<8x32xi1>
    %20 = arith.extui %19 : vector<8x32xi1> to vector<8x32xi32>
    %cst_5 = arith.constant dense<0> : vector<8xi32>
    %21 = vector.multi_reduction <add>, %20, %cst_5 [1] : vector<8x32xi32> to vector<8xi32>
    %22 = vector.shape_cast %21 : vector<8xi32> to vector<8x1xi32>
    %23 = tpu.iota {dimensions = array<i32: 1>} : vector<1x128xi32>
    %c0_i32_6 = arith.constant 0 : i32
    %24 = vector.broadcast %c0_i32_6 : i32 to vector<1x128xi32>
    %c0_i32_7 = arith.constant 0 : i32
    %25 = vector.broadcast %c0_i32_7 : i32 to vector<1x128xi32>
    %26 = arith.cmpi eq, %23, %25 : vector<1x128xi32>
    %c1_i32 = arith.constant 1 : i32
    %27 = vector.broadcast %c1_i32 : i32 to vector<1x128xi32>
    %28 = arith.select %26, %27, %24 : vector<1x128xi1>, vector<1x128xi32>
    %c1_i32_8 = arith.constant 1 : i32
    %29 = vector.broadcast %c1_i32_8 : i32 to vector<1x128xi32>
    %30 = arith.cmpi eq, %23, %29 : vector<1x128xi32>
    %c5_i32 = arith.constant 5 : i32
    %31 = vector.broadcast %c5_i32 : i32 to vector<1x128xi32>
    %32 = arith.select %30, %31, %28 : vector<1x128xi1>, vector<1x128xi32>
    %33 = vector.broadcast %22 : vector<8x1xi32> to vector<8x128xi32>
    %34 = vector.broadcast %32 : vector<1x128xi32> to vector<8x128xi32>
    %35 = arith.cmpi slt, %33, %34 : vector<8x128xi32>
    %36 = arith.extui %35 : vector<8x128xi1> to vector<8x128xi32>
    %37 = arith.sitofp %36 : vector<8x128xi32> to vector<8x128xf32>
    %c0_9 = arith.constant 0 : index
    %c0_10 = arith.constant 0 : index
    %38 = vector.load %arg3[%c0_9, %c0_10] : memref<1x128xf32, #tpu.memory_space<vmem>>, vector<1x128xf32>
    %cst_11 = arith.constant dense<0.000000e+00> : vector<128xf32>
    %39 = vector.multi_reduction <add>, %37, %cst_11 [0] : vector<8x128xf32> to vector<128xf32>
    %40 = vector.shape_cast %39 : vector<128xf32> to vector<1x128xf32>
    %41 = arith.addf %38, %40 : vector<1x128xf32>
    %c0_12 = arith.constant 0 : index
    %c0_13 = arith.constant 0 : index
    %42 = vector.load %arg3[%c0_12, %c0_13] : memref<1x128xf32, #tpu.memory_space<vmem>>, vector<1x128xf32>
    tpu.vector_store %arg3[%c0_12, %c0_13], %41 {strides = array<i32>} : memref<1x128xf32, #tpu.memory_space<vmem>>, vector<1x128xf32>,
    return
  }
  func.func @transform_0(%arg0: i32) -> (i32, i32) {
    %c0_i32 = arith.constant 0 : i32
    %c0_i32_0 = arith.constant 0 : i32
    return %arg0, %c0_i32 : i32, i32
  }
  func.func @transform_1(%arg0: i32) -> (i32, i32) {
    %c0_i32 = arith.constant 0 : i32
    %c0_i32_0 = arith.constant 0 : i32
    return %arg0, %c0_i32 : i32, i32
  }
  func.func @transform_2(%arg0: i32) -> (i32, i32) {
    %c0_i32 = arith.constant 0 : i32
    %c0_i32_0 = arith.constant 0 : i32
    %c0_i32_1 = arith.constant 0 : i32
    return %c0_i32, %c0_i32_0 : i32, i32
  }
}

</mosaic_0001>

<llo_original>
// kernel: tpu_custom_call.1
$region0: #{tpu_custom_call.1}
  #allocation0 [shape = 'u32[]', space=smem, size = 0x4, offset = 0x4, fixed_abs, tag = 'smem constant byte address 0x4 - core index']
  #allocation1 [shape = 'u32[72,128]{1,0:T(1,128)}', space=vmem, size = 0x9000, scoped, tag = 'internal scratch']
  %s0 = inlined_call_operand.vmem [shape: f32[8,32], index: 0, kind: input, shape index: {}]
  %s1 = inlined_call_operand.vmem [shape: s32[8,1], index: 1, kind: input, shape index: {}]
  %s2 = inlined_call_operand.hbm [shape: f32[1,128], index: 2, kind: output, shape index: {}]
  %s3 = sld [smem:[#allocation0]]
  $region22: #{tpu_custom_call.1} parent=0
    _
  %s5 = ssub.s32 1, %s3
  %s6 = scalar_select 0, %s5, %s3
  $region1: #{tpu_custom_call.1} parent=0
    #allocation2 [shape = 'u8[512]{0}', space=vmem, size = 0x400, scoped, tag = 'output window, operand 0, single buffered']
    #allocation3 [shape = 's32[1]{0}', space=sflag, size = 0x4, scoped, tag = 'scoped memory for tpu_custom_call.1']
    %7 = vsyncpa [#allocation3], 0
    // Predicated region
    $region2: #{tpu_custom_call.1} parent=1 // pred_check
      _
    $region3: #{tpu_custom_call.1} parent=1 // pred_check_branch
      %9 = sbr.rel (0) target = $region5
    $region4: #{tpu_custom_call.1} parent=1 // pred_region
      _
    $region5: #{tpu_custom_call.1} parent=1 // pred_fallthru
      _
    // Predicated region
    $region6: #{tpu_custom_call.1} parent=1 // pred_check
      _
    $region7: #{tpu_custom_call.1} parent=1 // pred_check_branch
      %11 = sbr.rel (0) target = $region9
    $region8: #{tpu_custom_call.1} parent=1 // pred_region
      _
    $region9: #{tpu_custom_call.1} parent=1 // pred_fallthru
      _
    %p12 = scmp.eq.s32.totalorder 0, 0
    // Predicated region
    $region10: #{tpu_custom_call.1} parent=1 // pred_check
      %p13 = pneg %p12
    $region11: #{tpu_custom_call.1} parent=1 // pred_check_branch
      %15 = sbr.rel (%p13) target = $region13
    $region12: #{tpu_custom_call.1} parent=1 // pred_region
      %16 = vst [vmem:[#allocation2] sm:$0x1] 0.0
    $region13: #{tpu_custom_call.1} parent=1 // pred_fallthru
      _
    %v17 = vld [vmem:[%s0] sm:$0xff]
    %v18 = vld [vmem:[%s1] sm:$0xff]
    %v19 = vlaneseq
    %v20 = vand.u32 %v19, 127
    %21 = vset.pattern.permute.xlu0 0
    %22 = vperm.xlu0 %21, %v18
    %v23 = vpop.permute.xlu0 %22
    %vm24 = vcmp.eq.s32.totalorder %v20, %v23
    %v25 = vsel %vm24, %v17, -inf
    %vm26 = vcmask 261120
    %v27 = vsel %vm26, %v25, -inf
    %28 = vmax.xlane.f32.xlu0 %v27
    %v29 = vpop.xlane.xlu0 %28
    %vm30 = vcmp.gt.f32.partialorder %v17, %v29
    %vm31 = vcmp.eq.f32.partialorder %v17, %v29
    %vm32 = vcmp.lt.s32.totalorder %v20, %v23
    %vm33 = vmand %vm31, %vm32
    %vm34 = vmor %vm30, %vm33
    %v35 = vsel %vm34, 1, 0
    %v36 = vsel %vm26, %v35, 0
    %v37 = vand.u32 %v36, 65535
    %v38 = vshrl.u32 %v36, 16
    %v39 = vcvt.s32.f32 %v37
    %v40 = vcvt.s32.f32 %v38
    %41 = vadd.xlane.f32.xlu0 %v39
    %v42 = vpop.xlane.xlu0 %41
    %43 = vadd.xlane.f32.xlu0 %v40
    %v44 = vpop.xlane.xlu0 %43
    %v45 = vcvt.f32.s32 %v42
    %v46 = vcvt.f32.s32 %v44
    %v47 = vshll.u32 %v46, 16
    %v48 = vadd.s32 %v47, %v45
    %vm49 = vcmp.eq.s32.totalorder %v20, 0
    %v50 = vsel %vm49, 1, 0
    %vm51 = vcmp.eq.s32.totalorder %v20, 1
    %v52 = vsel %vm51, 5, %v50
    %vm53 = vcmp.lt.s32.totalorder %v48, %v52
    %v54 = vsel %vm53, 1, 0
    %v55 = vcvt.s32.f32 %v54
    %v56 = vld [vmem:[#allocation2] sm:$0x1]
    %v57 = vrot.slane %v55, 4
    %v58 = vadd.f32 %v55, %v57
    %v59 = vrot.slane %v58, 2
    %v60 = vadd.f32 %v58, %v59
    %v61 = vrot.slane %v60, 1
    %v62 = vadd.f32 %v60, %v61
    %v63 = vadd.f32 %v56, %v62
    %64 = vst [vmem:[#allocation2] sm:$0x1] %v63
    // Predicated region
    $region14: #{tpu_custom_call.1} parent=1 // pred_check
      _
    $region15: #{tpu_custom_call.1} parent=1 // pred_check_branch
      %66 = sbr.rel (0) target = $region17
    $region16: #{tpu_custom_call.1} parent=1 // pred_region
      %68 = vsyncadd [#allocation3], 0
      %s70 = sshll.u32 [#allocation2], 4
      %s71 = int_to_ptr.vmem [resolvable:$true] %s70
      %s72 = sshll.u32 %s2, 4
      %s73 = int_to_ptr.hbm [resolvable:$true] %s72
      %75 = dma.vmem_to_hbm [thread:$0]  %s71, 16, %s73, [#allocation3]
    $region17: #{tpu_custom_call.1} parent=1 // pred_fallthru
      _
    // Predicated region
    $region18: #{tpu_custom_call.1} parent=1 // pred_check
      _
    $region19: #{tpu_custom_call.1} parent=1 // pred_check_branch
      %77 = sbr.rel (0) target = $region21
    $region20: #{tpu_custom_call.1} parent=1 // pred_region
      %79 = dma.done [#allocation3], 16
    $region21: #{tpu_custom_call.1} parent=1 // pred_fallthru
      _
    %80 = vsyncpa [#allocation3], 1

</llo_original>
